<compile_context>
chip_gen: v7x
topology: tpu7x:2x2x1
jax: 0.10.0
libtpu: 0.0.40
codegen_flags: <defaults>
</compile_context>

<pallas_src>
import functools

import jax
import jax.numpy as jnp
from jax.experimental import pallas as pl
from jax.experimental.pallas import tpu as pltpu


def gcn_kernel(a_ref, h_ref, pool_ref, w_ref, w5_ref, b_ref, b5_ref, out_ref, *, inv_n):
    a = a_ref[0]            # [M, M] bf16 block-diagonal normalized adjacency (M = Bt*N)
    h = h_ref[0]            # [M, P] bf16 node features (zero-padded lanes)
    b = b_ref[...]          # [4, P] f32 biases b1..b4

    # --- GraphConv 1: relu(A @ H @ W1 + b1), f32 accumulation, bf16 MXU operands ---
    ah = jnp.dot(a, h, preferred_element_type=jnp.float32)
    h1 = jnp.maximum(
        jnp.dot(ah.astype(jnp.bfloat16), w_ref[0],
                preferred_element_type=jnp.float32) + b[0:1, :], 0.0)

    # --- GraphConv 2: relu(A @ H1 @ W2 + b2) ---
    ah1 = jnp.dot(a, h1.astype(jnp.bfloat16), preferred_element_type=jnp.float32)
    h2 = jnp.maximum(
        jnp.dot(ah1.astype(jnp.bfloat16), w_ref[1],
                preferred_element_type=jnp.float32) + b[1:2, :], 0.0)

    # --- dgl.mean_nodes: per-graph pooling matmul, pooled BEFORE W3 (P*P MACs, not N*P*P) ---
    hg = jnp.dot(pool_ref[...], h2.astype(jnp.bfloat16),
                 preferred_element_type=jnp.float32) * inv_n          # [Bt, P]

    # --- dense1: two Linear + ReLU, batched over the Bt graphs of this step ---
    d1 = jnp.maximum(
        jnp.dot(hg.astype(jnp.bfloat16), w_ref[2],
                preferred_element_type=jnp.float32) + b[2:3, :], 0.0)
    d2 = jnp.maximum(
        jnp.dot(d1.astype(jnp.bfloat16), w_ref[3],
                preferred_element_type=jnp.float32) + b[3:4, :], 0.0)

    # --- dense2: Linear(h4 -> 1) into a lane-dense 128-wide block.
    #     W5 columns 1..127 and b5 lanes 1..127 are zero, so lanes 1..127 stay exactly 0. ---
    out_ref[0] = jnp.dot(d2.astype(jnp.bfloat16), w5_ref[...],
                         preferred_element_type=jnp.float32) + b5_ref[...]   # [Bt, 128]


def _pad_weight(w, p):
    fin, fout = w.shape
    return jnp.zeros((p, p), jnp.float32).at[:fin, :fout].set(jnp.asarray(w, jnp.float32))


def _pad_bias(bias, p):
    bias = jnp.asarray(bias, jnp.float32).reshape(-1)
    return jnp.zeros((p,), jnp.float32).at[:bias.shape[0]].set(bias)


def pack_params(params, p):
    """Pack (W1,b1,...,W5,b5) -> W_slab [4,P,P] bf16, W5 [P,128] bf16, B_slab [4,P] f32, b5 [1,128] f32."""
    ws = params[0::2]
    bs = params[1::2]
    w_slab = jnp.stack([_pad_weight(w, p) for w in ws[:4]]).astype(jnp.bfloat16)
    w5 = jnp.asarray(ws[4], jnp.float32)
    w5_pad = (jnp.zeros((p, 128), jnp.float32)
              .at[:w5.shape[0], :w5.shape[1]].set(w5).astype(jnp.bfloat16))
    b_slab = jnp.stack([_pad_bias(bs[i], p) for i in range(4)])                  # [4, P] f32
    b5_pad = (jnp.zeros((1, 128), jnp.float32)
              .at[0, 0].set(jnp.asarray(bs[4], jnp.float32).reshape(-1)[0]))     # lane 0 only
    return w_slab, w5_pad, b_slab, b5_pad


def gcn_forward(a_norm, h, params, *, target_rows=256):
    """a_norm: [B,N,N], h: [B,N,F], params: (W1,b1,...,W5,b5). Returns [B,1] f32."""
    a_norm = jnp.asarray(a_norm, jnp.float32)
    h = jnp.asarray(h, jnp.float32)
    B, N, F = h.shape

    # Common padded width P: covers the input dim and all hidden dims, multiple of 8 sublanes.
    dims = [F]
    for i in range(4):
        dims += list(params[2 * i].shape)
    dims.append(params[8].shape[0])
    P = int(-(-max(dims) // 8) * 8)

    # Graphs per grid step: aim Bt*N at one MXU tile (256), but keep >= 2 grid steps when
    # B > 1 so v7x can shard the batch across both TensorCores.
    bt = max(1, min(target_rows // max(N, 1), B))
    if B > 1:
        bt = min(bt, -(-B // 2))
    num_steps = -(-B // bt)
    Bp = num_steps * bt
    M = bt * N

    # Zero-pad the batch to a multiple of Bt; padded graphs are all-zero, stay isolated in the
    # block-diagonal structure, and are sliced off at the end.
    a_pad = jnp.zeros((Bp, N, N), jnp.float32).at[:B].set(a_norm)
    h_pad = jnp.zeros((Bp, N, P), jnp.float32).at[:B, :, :F].set(h)

    # Block-diagonal adjacency super-tile per step: one dense [M,M] @ [M,P] per GraphConv.
    eye_bt = jnp.eye(bt, dtype=jnp.float32)
    a_bd = jnp.einsum('gbij,bc->gbicj',
                      a_pad.reshape(num_steps, bt, N, N), eye_bt).reshape(num_steps, M, M)
    h_flat = h_pad.reshape(num_steps, M, P)

    # Per-graph mean pooling as a matmul: row b has ones over its own N node rows
    # (the 1/N scale is applied in f32 inside the kernel to avoid bf16 rounding of 1/N).
    pool = jnp.repeat(jnp.eye(bt, dtype=jnp.float32), N, axis=1)     # [Bt, M]

    w_slab, w5_pad, b_slab, b5_pad = pack_params(params, P)

    # bf16 operands -> full-rate MXU and half the DMA bytes; accumulation stays f32 in-kernel.
    a_bd = a_bd.astype(jnp.bfloat16)
    h_flat = h_flat.astype(jnp.bfloat16)
    pool = pool.astype(jnp.bfloat16)

    kernel = functools.partial(gcn_kernel, inv_n=1.0 / float(N))

    # Advisory cost hint so XLA can overlap this small custom call with surrounding ops.
    flops = 2 * num_steps * (2 * M * M * P + 2 * M * P * P + bt * M * P
                             + 2 * bt * P * P + bt * P * 128)
    bytes_accessed = (2 * (num_steps * (M * M + M * P) + bt * M + 4 * P * P + P * 128)
                      + 4 * (4 * P + 128 + num_steps * bt * 128))

    out = pl.pallas_call(
        kernel,
        out_shape=jax.ShapeDtypeStruct((num_steps, bt, 128), jnp.float32),
        grid=(num_steps,),
        in_specs=[
            pl.BlockSpec((1, M, M), lambda g: (g, 0, 0)),   # block-diag adjacency super-tile
            pl.BlockSpec((1, M, P), lambda g: (g, 0, 0)),   # flattened node features
            pl.BlockSpec((bt, M), lambda g: (0, 0)),        # pooling matrix (resident)
            pl.BlockSpec((4, P, P), lambda g: (0, 0, 0)),   # W1..W4 slab (resident)
            pl.BlockSpec((P, 128), lambda g: (0, 0)),       # W5, lane-dense (resident)
            pl.BlockSpec((4, P), lambda g: (0, 0)),         # b1..b4 (resident)
            pl.BlockSpec((1, 128), lambda g: (0, 0)),       # b5 in lane 0 only (resident)
        ],
        out_specs=pl.BlockSpec((1, bt, 128), lambda g: (g, 0, 0)),
        compiler_params=pltpu.CompilerParams(
            dimension_semantics=("parallel",)),             # v7x: shard steps across both TCs
        cost_estimate=pl.CostEstimate(
            flops=int(flops), transcendentals=0, bytes_accessed=int(bytes_accessed)),
    )(a_bd, h_flat, pool, w_slab, w5_pad, b_slab, b5_pad)

    return out.reshape(Bp, 128)[:B, :1]    # [B, 1]
    # TODO(synk): ragged graphs (per-graph node counts != N) need per-graph 1/n_g scales in the
    # pooling matrix and masked adjacency rows; this kernel assumes a dense batch of size-N graphs.
    # TODO(synk): for N in the thousands, row-tile A_bd ((tm, M) blocks, reduction axis last,
    # f32 VMEM accumulator, explicit vmem_limit_bytes) with tm ~halved on v7x (64 MiB VMEM).


def normalize_adjacency(adj):
    """DGL GraphConv norm='both': D^{-1/2} A D^{-1/2} (zero-degree -> 0). Batched."""
    deg = jnp.sum(adj, axis=-1)
    d_inv_sqrt = jnp.where(deg > 0, 1.0 / jnp.sqrt(jnp.maximum(deg, 1e-12)), 0.0)
    return d_inv_sqrt[..., :, None] * adj * d_inv_sqrt[..., None, :]


def init_params(key, input_dim, h1, h2, h3, h4):
    dims = [(input_dim, h1), (h1, h2), (h2, h3), (h3, h4), (h4, 1)]
    params = []
    for fin, fout in dims:
        kw, key = jax.random.split(key)
        scale = jnp.sqrt(2.0 / (fin + fout)).astype(jnp.float32)
        w = jax.random.normal(kw, (fin, fout), dtype=jnp.float32) * scale
        b = jnp.zeros((1, fout), dtype=jnp.float32)
        params += [w, b]
    return tuple(params)


def gcn_reference(a_norm, h, params):
    """Pure-JAX f32 reference of the original module's forward (dense batch)."""
    w1, b1, w2, b2, w3, b3, w4, b4, w5, b5 = params
    h1 = jax.nn.relu(jnp.einsum('bij,bjf->bif', a_norm, h) @ w1 + b1)
    h2 = jax.nn.relu(jnp.einsum('bij,bjf->bif', a_norm, h1) @ w2 + b2)
    hg = jnp.mean(h2, axis=1)
    d1 = jax.nn.relu(hg @ w3 + b3)
    d2 = jax.nn.relu(d1 @ w4 + b4)
    return d2 @ w5 + b5


if __name__ == "__main__":
    # Batch of B=4 graphs, N=8 nodes each, input_dim=16, hidden dims (32, 32, 16, 8).
    B, N, INPUT_DIM = 4, 8, 16
    H1, H2, H3, H4 = 32, 32, 16, 8

    key = jax.random.PRNGKey(0)
    k_adj, k_feat, k_par = jax.random.split(key, 3)

    # Random symmetric 0/1 adjacencies with self loops (avoids zero degree).
    rand = jax.random.uniform(k_adj, (B, N, N))
    upper = (rand > 0.5).astype(jnp.float32)
    adj = jnp.triu(upper, 1)
    adj = adj + jnp.swapaxes(adj, -1, -2) + jnp.eye(N, dtype=jnp.float32)[None]
    a_norm = normalize_adjacency(adj)

    h = jax.random.normal(k_feat, (B, N, INPUT_DIM), dtype=jnp.float32)
    params = init_params(k_par, INPUT_DIM, H1, H2, H3, H4)

    out = gcn_forward(a_norm, h, params)
    out = jax.block_until_ready(out)
    assert out.shape == (B, 1)

    # Loose tolerance: kernel uses bf16 operands with f32 accumulation.
    ref = gcn_reference(a_norm, h, params)
    assert jnp.allclose(out, ref, rtol=5e-2, atol=5e-2), (out, ref)
    print("KERNEL_OK")
</pallas_src>

<mosaic_0001>
module attributes {stable_mosaic.version = 11 : i64} {
  func.func @gcn_kernel(%arg0: i32, %arg1: memref<1x16x16xbf16, #tpu.memory_space<vmem>>, %arg2: memref<1x16x32xbf16, #tpu.memory_space<vmem>>, %arg3: memref<2x16xbf16, #tpu.memory_space<vmem>>, %arg4: memref<4x32x32xbf16, #tpu.memory_space<vmem>>, %arg5: memref<32x128xbf16, #tpu.memory_space<vmem>>, %arg6: memref<4x32xf32, #tpu.memory_space<vmem>>, %arg7: memref<1x128xf32, #tpu.memory_space<vmem>>, %arg8: memref<1x2x128xf32, #tpu.memory_space<vmem>>) attributes {dimension_semantics = [#tpu.dimension_semantics<parallel>], iteration_bounds = array<i64: 2>, scalar_prefetch = 0 : i64, scratch_operands = 0 : i64, tpu.core_type = #tpu.core_type<tc>, window_params = [{transform_indices = @transform_0, window_bounds = array<i64: 1, 16, 16>}, {transform_indices = @transform_1, window_bounds = array<i64: 1, 16, 32>}, {pipeline_mode = #tpu.pipeline_mode<synchronous>, transform_indices = @transform_2, window_bounds = array<i64: 2, 16>}, {pipeline_mode = #tpu.pipeline_mode<synchronous>, transform_indices = @transform_3, window_bounds = array<i64: 4, 32, 32>}, {pipeline_mode = #tpu.pipeline_mode<synchronous>, transform_indices = @transform_4, window_bounds = array<i64: 32, 128>}, {pipeline_mode = #tpu.pipeline_mode<synchronous>, transform_indices = @transform_5, window_bounds = array<i64: 4, 32>}, {pipeline_mode = #tpu.pipeline_mode<synchronous>, transform_indices = @transform_6, window_bounds = array<i64: 1, 128>}, {transform_indices = @transform_7, window_bounds = array<i64: 1, 2, 128>}]} {
    %c0 = arith.constant 0 : index
    %c0_0 = arith.constant 0 : index
    %c0_1 = arith.constant 0 : index
    %0 = vector.load %arg1[%c0, %c0_0, %c0_1] : memref<1x16x16xbf16, #tpu.memory_space<vmem>>, vector<1x16x16xbf16>
    %1 = vector.shape_cast %0 : vector<1x16x16xbf16> to vector<16x16xbf16>
    %c0_2 = arith.constant 0 : index
    %c0_3 = arith.constant 0 : index
    %c0_4 = arith.constant 0 : index
    %2 = vector.load %arg2[%c0_2, %c0_3, %c0_4] : memref<1x16x32xbf16, #tpu.memory_space<vmem>>, vector<1x16x32xbf16>
    %3 = vector.shape_cast %2 : vector<1x16x32xbf16> to vector<16x32xbf16>
    %c0_5 = arith.constant 0 : index
    %c0_6 = arith.constant 0 : index
    %4 = vector.load %arg6[%c0_5, %c0_6] : memref<4x32xf32, #tpu.memory_space<vmem>>, vector<4x32xf32>
    %cst = arith.constant dense<0.000000e+00> : vector<16x32xf32>
    %5 = tpu.matmul %1, %3, %cst {dimension_numbers = #tpu.dot_dimension_numbers<[1], [0], [0], [1], [0, 0, 1, 1], [], []>} : vector<16x16xbf16>, vector<16x32xbf16>, vector<16x32xf32> -> vector<16x32xf32>
    %6 = arith.truncf %5 : vector<16x32xf32> to vector<16x32xbf16>
    %c0_7 = arith.constant 0 : index
    %c0_8 = arith.constant 0 : index
    %c0_9 = arith.constant 0 : index
    %7 = vector.load %arg4[%c0_7, %c0_8, %c0_9] : memref<4x32x32xbf16, #tpu.memory_space<vmem>>, vector<1x32x32xbf16>
    %8 = vector.shape_cast %7 : vector<1x32x32xbf16> to vector<32x32xbf16>
    %cst_10 = arith.constant dense<0.000000e+00> : vector<16x32xf32>
    %9 = tpu.matmul %6, %8, %cst_10 {dimension_numbers = #tpu.dot_dimension_numbers<[1], [0], [0], [1], [0, 0, 1, 1], [], []>} : vector<16x32xbf16>, vector<32x32xbf16>, vector<16x32xf32> -> vector<16x32xf32>
    %10 = vector.extract_strided_slice %4 {offsets = [0, 0], sizes = [1, 32], strides = [1, 1]} : vector<4x32xf32> to vector<1x32xf32>
    %11 = vector.broadcast %10 : vector<1x32xf32> to vector<16x32xf32>
    %12 = arith.addf %9, %11 : vector<16x32xf32>
    %cst_11 = arith.constant 0.000000e+00 : f32
    %13 = vector.broadcast %cst_11 : f32 to vector<16x32xf32>
    %14 = arith.maximumf %12, %13 : vector<16x32xf32>
    %15 = arith.truncf %14 : vector<16x32xf32> to vector<16x32xbf16>
    %cst_12 = arith.constant dense<0.000000e+00> : vector<16x32xf32>
    %16 = tpu.matmul %1, %15, %cst_12 {dimension_numbers = #tpu.dot_dimension_numbers<[1], [0], [0], [1], [0, 0, 1, 1], [], []>} : vector<16x16xbf16>, vector<16x32xbf16>, vector<16x32xf32> -> vector<16x32xf32>
    %17 = arith.truncf %16 : vector<16x32xf32> to vector<16x32xbf16>
    %c1 = arith.constant 1 : index
    %c0_13 = arith.constant 0 : index
    %c0_14 = arith.constant 0 : index
    %18 = vector.load %arg4[%c1, %c0_13, %c0_14] : memref<4x32x32xbf16, #tpu.memory_space<vmem>>, vector<1x32x32xbf16>
    %19 = vector.shape_cast %18 : vector<1x32x32xbf16> to vector<32x32xbf16>
    %cst_15 = arith.constant dense<0.000000e+00> : vector<16x32xf32>
    %20 = tpu.matmul %17, %19, %cst_15 {dimension_numbers = #tpu.dot_dimension_numbers<[1], [0], [0], [1], [0, 0, 1, 1], [], []>} : vector<16x32xbf16>, vector<32x32xbf16>, vector<16x32xf32> -> vector<16x32xf32>
    %21 = vector.extract_strided_slice %4 {offsets = [1, 0], sizes = [1, 32], strides = [1, 1]} : vector<4x32xf32> to vector<1x32xf32>
    %22 = vector.broadcast %21 : vector<1x32xf32> to vector<16x32xf32>
    %23 = arith.addf %20, %22 : vector<16x32xf32>
    %cst_16 = arith.constant 0.000000e+00 : f32
    %24 = vector.broadcast %cst_16 : f32 to vector<16x32xf32>
    %25 = arith.maximumf %23, %24 : vector<16x32xf32>
    %c0_17 = arith.constant 0 : index
    %c0_18 = arith.constant 0 : index
    %26 = vector.load %arg3[%c0_17, %c0_18] : memref<2x16xbf16, #tpu.memory_space<vmem>>, vector<2x16xbf16>
    %27 = arith.truncf %25 : vector<16x32xf32> to vector<16x32xbf16>
    %cst_19 = arith.constant dense<0.000000e+00> : vector<2x32xf32>
    %28 = tpu.matmul %26, %27, %cst_19 {dimension_numbers = #tpu.dot_dimension_numbers<[1], [0], [0], [1], [0, 0, 1, 1], [], []>} : vector<2x16xbf16>, vector<16x32xbf16>, vector<2x32xf32> -> vector<2x32xf32>
    %cst_20 = arith.constant 1.250000e-01 : f32
    %29 = vector.broadcast %cst_20 : f32 to vector<2x32xf32>
    %30 = arith.mulf %28, %29 : vector<2x32xf32>
    %31 = arith.truncf %30 : vector<2x32xf32> to vector<2x32xbf16>
    %c2 = arith.constant 2 : index
    %c0_21 = arith.constant 0 : index
    %c0_22 = arith.constant 0 : index
    %32 = vector.load %arg4[%c2, %c0_21, %c0_22] : memref<4x32x32xbf16, #tpu.memory_space<vmem>>, vector<1x32x32xbf16>
    %33 = vector.shape_cast %32 : vector<1x32x32xbf16> to vector<32x32xbf16>
    %cst_23 = arith.constant dense<0.000000e+00> : vector<2x32xf32>
    %34 = tpu.matmul %31, %33, %cst_23 {dimension_numbers = #tpu.dot_dimension_numbers<[1], [0], [0], [1], [0, 0, 1, 1], [], []>} : vector<2x32xbf16>, vector<32x32xbf16>, vector<2x32xf32> -> vector<2x32xf32>
    %35 = vector.extract_strided_slice %4 {offsets = [2, 0], sizes = [1, 32], strides = [1, 1]} : vector<4x32xf32> to vector<1x32xf32>
    %36 = vector.broadcast %35 : vector<1x32xf32> to vector<2x32xf32>
    %37 = arith.addf %34, %36 : vector<2x32xf32>
    %cst_24 = arith.constant 0.000000e+00 : f32
    %38 = vector.broadcast %cst_24 : f32 to vector<2x32xf32>
    %39 = arith.maximumf %37, %38 : vector<2x32xf32>
    %40 = arith.truncf %39 : vector<2x32xf32> to vector<2x32xbf16>
    %c3 = arith.constant 3 : index
    %c0_25 = arith.constant 0 : index
    %c0_26 = arith.constant 0 : index
    %41 = vector.load %arg4[%c3, %c0_25, %c0_26] : memref<4x32x32xbf16, #tpu.memory_space<vmem>>, vector<1x32x32xbf16>
    %42 = vector.shape_cast %41 : vector<1x32x32xbf16> to vector<32x32xbf16>
    %cst_27 = arith.constant dense<0.000000e+00> : vector<2x32xf32>
    %43 = tpu.matmul %40, %42, %cst_27 {dimension_numbers = #tpu.dot_dimension_numbers<[1], [0], [0], [1], [0, 0, 1, 1], [], []>} : vector<2x32xbf16>, vector<32x32xbf16>, vector<2x32xf32> -> vector<2x32xf32>
    %44 = vector.extract_strided_slice %4 {offsets = [3, 0], sizes = [1, 32], strides = [1, 1]} : vector<4x32xf32> to vector<1x32xf32>
    %45 = vector.broadcast %44 : vector<1x32xf32> to vector<2x32xf32>
    %46 = arith.addf %43, %45 : vector<2x32xf32>
    %cst_28 = arith.constant 0.000000e+00 : f32
    %47 = vector.broadcast %cst_28 : f32 to vector<2x32xf32>
    %48 = arith.maximumf %46, %47 : vector<2x32xf32>
    %49 = arith.truncf %48 : vector<2x32xf32> to vector<2x32xbf16>
    %c0_29 = arith.constant 0 : index
    %c0_30 = arith.constant 0 : index
    %50 = vector.load %arg5[%c0_29, %c0_30] : memref<32x128xbf16, #tpu.memory_space<vmem>>, vector<32x128xbf16>
    %cst_31 = arith.constant dense<0.000000e+00> : vector<2x128xf32>
    %51 = tpu.matmul %49, %50, %cst_31 {dimension_numbers = #tpu.dot_dimension_numbers<[1], [0], [0], [1], [0, 0, 1, 1], [], []>} : vector<2x32xbf16>, vector<32x128xbf16>, vector<2x128xf32> -> vector<2x128xf32>
    %c0_32 = arith.constant 0 : index
    %c0_33 = arith.constant 0 : index
    %52 = vector.load %arg7[%c0_32, %c0_33] : memref<1x128xf32, #tpu.memory_space<vmem>>, vector<1x128xf32>
    %53 = vector.broadcast %52 : vector<1x128xf32> to vector<2x128xf32>
    %54 = arith.addf %51, %53 : vector<2x128xf32>
    %c0_34 = arith.constant 0 : index
    %c0_35 = arith.constant 0 : index
    %c0_36 = arith.constant 0 : index
    %55 = vector.load %arg8[%c0_34, %c0_35, %c0_36] : memref<1x2x128xf32, #tpu.memory_space<vmem>>, vector<1x2x128xf32>
    %56 = vector.shape_cast %55 : vector<1x2x128xf32> to vector<2x128xf32>
    %57 = vector.shape_cast %54 : vector<2x128xf32> to vector<1x2x128xf32>
    tpu.vector_store %arg8[%c0_34, %c0_35, %c0_36], %57 {strides = array<i32>} : memref<1x2x128xf32, #tpu.memory_space<vmem>>, vector<1x2x128xf32>,
    return
  }
  func.func @transform_0(%arg0: i32) -> (i32, i32, i32) {
    %c0_i32 = arith.constant 0 : i32
    %c0_i32_0 = arith.constant 0 : i32
    %c0_i32_1 = arith.constant 0 : i32
    return %arg0, %c0_i32, %c0_i32_0 : i32, i32, i32
  }
  func.func @transform_1(%arg0: i32) -> (i32, i32, i32) {
    %c0_i32 = arith.constant 0 : i32
    %c0_i32_0 = arith.constant 0 : i32
    %c0_i32_1 = arith.constant 0 : i32
    return %arg0, %c0_i32, %c0_i32_0 : i32, i32, i32
  }
  func.func @transform_2(%arg0: i32) -> (i32, i32) {
    %c0_i32 = arith.constant 0 : i32
    %c0_i32_0 = arith.constant 0 : i32
    %c0_i32_1 = arith.constant 0 : i32
    return %c0_i32, %c0_i32_0 : i32, i32
  }
  func.func @transform_3(%arg0: i32) -> (i32, i32, i32) {
    %c0_i32 = arith.constant 0 : i32
    %c0_i32_0 = arith.constant 0 : i32
    %c0_i32_1 = arith.constant 0 : i32
    %c0_i32_2 = arith.constant 0 : i32
    return %c0_i32, %c0_i32_0, %c0_i32_1 : i32, i32, i32
  }
  func.func @transform_4(%arg0: i32) -> (i32, i32) {
    %c0_i32 = arith.constant 0 : i32
    %c0_i32_0 = arith.constant 0 : i32
    %c0_i32_1 = arith.constant 0 : i32
    return %c0_i32, %c0_i32_0 : i32, i32
  }
  func.func @transform_5(%arg0: i32) -> (i32, i32) {
    %c0_i32 = arith.constant 0 : i32
    %c0_i32_0 = arith.constant 0 : i32
    %c0_i32_1 = arith.constant 0 : i32
    return %c0_i32, %c0_i32_0 : i32, i32
  }
  func.func @transform_6(%arg0: i32) -> (i32, i32) {
    %c0_i32 = arith.constant 0 : i32
    %c0_i32_0 = arith.constant 0 : i32
    %c0_i32_1 = arith.constant 0 : i32
    return %c0_i32, %c0_i32_0 : i32, i32
  }
  func.func @transform_7(%arg0: i32) -> (i32, i32, i32) {
    %c0_i32 = arith.constant 0 : i32
    %c0_i32_0 = arith.constant 0 : i32
    %c0_i32_1 = arith.constant 0 : i32
    return %arg0, %c0_i32, %c0_i32_0 : i32, i32, i32
  }
}

</mosaic_0001>

<llo_original>
// kernel: tpu_custom_call.1
$region0: #{tpu_custom_call.1}
  #allocation0 [shape = 'u32[]', space=smem, size = 0x4, offset = 0x4, fixed_abs, tag = 'smem constant byte address 0x4 - core index']
  #allocation1 [shape = 'u32[144,128]{1,0:T(1,128)}', space=vmem, size = 0x12000, scoped, tag = 'internal scratch']
  %s0 = inlined_call_operand.hbm [shape: bf16[2,16,16], index: 0, kind: input, shape index: {}]
  %s1 = inlined_call_operand.hbm [shape: bf16[2,16,32], index: 1, kind: input, shape index: {}]
  %s2 = inlined_call_operand.vmem [shape: bf16[2,16], index: 2, kind: input, shape index: {}]
  %s3 = inlined_call_operand.hbm [shape: bf16[4,32,32], index: 3, kind: input, shape index: {}]
  %s4 = inlined_call_operand.hbm [shape: bf16[32,128], index: 4, kind: input, shape index: {}]
  %s5 = inlined_call_operand.vmem [shape: f32[4,32], index: 5, kind: input, shape index: {}]
  %s6 = inlined_call_operand.vmem [shape: f32[1,128], index: 6, kind: input, shape index: {}]
  %s7 = inlined_call_operand.hbm [shape: f32[2,2,128], index: 7, kind: output, shape index: {}]
  %s8 = sld [smem:[#allocation0]]
  $region77: #{tpu_custom_call.1} parent=0
    _
  %s10 = ssub.s32 1, %s8
  %s11 = scalar_select 0, %s10, %s8
  $region1: #{tpu_custom_call.1} parent=0
    #allocation2 [shape = 'u8[8192]{0}', space=vmem, size = 0x2000, scoped, tag = 'input window, operand 0']
    #allocation3 [shape = 's32[2]{0}', space=sflag, size = 0x8, scoped, tag = 'scoped memory for tpu_custom_call.1']
    #allocation4 [shape = 's32[2]{0}', space=sflag, size = 0x8, scoped, tag = 'scoped memory for tpu_custom_call.1']
    #allocation5 [shape = 'u8[8192]{0}', space=vmem, size = 0x2000, scoped, tag = 'input window, operand 1']
    #allocation6 [shape = 's32[2]{0}', space=sflag, size = 0x8, scoped, tag = 'scoped memory for tpu_custom_call.1']
    #allocation7 [shape = 'u8[32768]{0}', space=vmem, size = 0x8000, scoped, tag = 'input window, operand 3, single buffered']
    #allocation8 [shape = 'u8[8192]{0}', space=vmem, size = 0x2000, scoped, tag = 'input window, operand 4, single buffered']
    #allocation9 [shape = 's32[1]{0}', space=sflag, size = 0x4, scoped, tag = 'scoped memory for tpu_custom_call.1']
    #allocation10 [shape = 'u8[2048]{0}', space=vmem, size = 0x800, scoped, tag = 'output window, operand 0']
    %12 = vsyncpa [#allocation3], 0
    %s13 = scalar_lea.sflag [#allocation3], 1
    %14 = vsyncpa %s13, 0
    %15 = vsyncpa [#allocation6], 0
    %s16 = scalar_lea.sflag [#allocation6], 1
    %17 = vsyncpa %s16, 0
    %18 = vsyncpa [#allocation9], 0
    %19 = vsyncpa [#allocation4], 0
    %s20 = scalar_lea.sflag [#allocation4], 1
    %21 = vsyncpa %s20, 0
    loop: start=0, step=1, limit=4
    $region2: #{tpu_custom_call.1} parent=1 // loop_pre_header
      _
    $region3: #{tpu_custom_call.1} parent=1 // loop_header
      %s23 = sphi 0, %s27
      %p24 = scmp.ge.s32.totalorder %s23, 4
      %s33 = sphi 0, %s35
      %s36 = sphi 0, %s33
      %s37 = sphi 0, %s36
      %s53 = sphi 0, %s37
      %s59 = sphi 0, %s61
      %s62 = sphi 0, %s59
      %s63 = sphi 0, %s62
      %s79 = sphi 0, %s63
      %s83 = sphi 0, %s83
      %s85 = sphi 0, %s83
      %s86 = sphi 0, %s85
      %s100 = sphi 0, %s86
      %s104 = sphi 0, %s104
      %s106 = sphi 0, %s104
      %s107 = sphi 0, %s106
      %s121 = sphi 0, %s107
      %s125 = sphi 0, %s125
      %s127 = sphi 0, %s125
      %s128 = sphi 0, %s127
      %s142 = sphi 0, %s128
      %s146 = sphi 0, %s146
      %s148 = sphi 0, %s146
      %s149 = sphi 0, %s148
      %s163 = sphi 0, %s149
      %s167 = sphi 0, %s167
      %s169 = sphi 0, %s167
      %s170 = sphi 0, %s169
      %s184 = sphi 0, %s170
      %s190 = sphi 0, %s192
      %s193 = sphi 0, %s190
      %s194 = sphi 0, %s193
      %s210 = sphi 0, %s194
    $region4: #{tpu_custom_call.1} parent=1 // loop_header_branch
      %26 = sbr.rel (%p24) target = $region8
    $region5: #{tpu_custom_call.1} parent=1 // loop_body
      %s28 = ssub.s32 %s23, 1
      %s29 = ssub.s32 %s23, 2
      %s30 = sadd.s32 %s23, 1
      %s31 = ssub.s32 %s23, %s30
      %p32 = scmp.eq.s32.totalorder %s31, 0
      %s34 = sadd.s32 %s33, 1
      %s35 = scalar_select %p32, %s33, %s34
      %p38 = pneg %p32
      %p39 = scmp.eq.s32.totalorder %s23, 1
      %p40 = por %p38, %p39
      %p41 = scmp.ne.s32.totalorder %s33, %s36
      %p42 = scmp.eq.s32.totalorder %s23, 0
      %p43 = por %p41, %p42
      %p44 = scmp.ne.s32.totalorder %s33, %s36
      %p45 = scmp.eq.s32.totalorder %s28, 1
      %p46 = por %p44, %p45
      %p47 = scmp.ne.s32.totalorder %s36, %s37
      %p48 = scmp.eq.s32.totalorder %s28, 0
      %p49 = por %p47, %p48
      %p50 = scmp.ne.s32.totalorder %s36, %s37
      %p51 = scmp.eq.s32.totalorder %s29, 1
      %p52 = por %p50, %p51
      %p54 = scmp.ne.s32.totalorder %s37, %s53
      %p55 = scmp.eq.s32.totalorder %s29, 0
      %p56 = por %p54, %p55
      %s57 = ssub.s32 %s23, %s30
      %p58 = scmp.eq.s32.totalorder %s57, 0
      %s60 = sadd.s32 %s59, 1
      %s61 = scalar_select %p58, %s59, %s60
      %p64 = pneg %p58
      %p65 = scmp.eq.s32.totalorder %s23, 1
      %p66 = por %p64, %p65
      %p67 = scmp.ne.s32.totalorder %s59, %s62
      %p68 = scmp.eq.s32.totalorder %s23, 0
      %p69 = por %p67, %p68
      %p70 = scmp.ne.s32.totalorder %s59, %s62
      %p71 = scmp.eq.s32.totalorder %s28, 1
      %p72 = por %p70, %p71
      %p73 = scmp.ne.s32.totalorder %s62, %s63
      %p74 = scmp.eq.s32.totalorder %s28, 0
      %p75 = por %p73, %p74
      %p76 = scmp.ne.s32.totalorder %s62, %s63
      %p77 = scmp.eq.s32.totalorder %s29, 1
      %p78 = por %p76, %p77
      %p80 = scmp.ne.s32.totalorder %s63, %s79
      %p81 = scmp.eq.s32.totalorder %s29, 0
      %p82 = por %p80, %p81
      %s84 = sadd.s32 %s83, 1
      %p87 = scmp.eq.s32.totalorder %s23, 1
      %p88 = scmp.ne.s32.totalorder %s83, %s85
      %p89 = scmp.eq.s32.totalorder %s23, 0
      %p90 = por %p88, %p89
      %p91 = scmp.ne.s32.totalorder %s83, %s85
      %p92 = scmp.eq.s32.totalorder %s28, 1
      %p93 = por %p91, %p92
      %p94 = scmp.ne.s32.totalorder %s85, %s86
      %p95 = scmp.eq.s32.totalorder %s28, 0
      %p96 = por %p94, %p95
      %p97 = scmp.ne.s32.totalorder %s85, %s86
      %p98 = scmp.eq.s32.totalorder %s29, 1
      %p99 = por %p97, %p98
      %p101 = scmp.ne.s32.totalorder %s86, %s100
      %p102 = scmp.eq.s32.totalorder %s29, 0
      %p103 = por %p101, %p102
      %s105 = sadd.s32 %s104, 1
      %p108 = scmp.eq.s32.totalorder %s23, 1
      %p109 = scmp.ne.s32.totalorder %s104, %s106
      %p110 = scmp.eq.s32.totalorder %s23, 0
      %p111 = por %p109, %p110
      %p112 = scmp.ne.s32.totalorder %s104, %s106
      %p113 = scmp.eq.s32.totalorder %s28, 1
      %p114 = por %p112, %p113
      %p115 = scmp.ne.s32.totalorder %s106, %s107
      %p116 = scmp.eq.s32.totalorder %s28, 0
      %p117 = por %p115, %p116
      %p118 = scmp.ne.s32.totalorder %s106, %s107
      %p119 = scmp.eq.s32.totalorder %s29, 1
      %p120 = por %p118, %p119
      %p122 = scmp.ne.s32.totalorder %s107, %s121
      %p123 = scmp.eq.s32.totalorder %s29, 0
      %p124 = por %p122, %p123
      %s126 = sadd.s32 %s125, 1
      %p129 = scmp.eq.s32.totalorder %s23, 1
      %p130 = scmp.ne.s32.totalorder %s125, %s127
      %p131 = scmp.eq.s32.totalorder %s23, 0
      %p132 = por %p130, %p131
      %p133 = scmp.ne.s32.totalorder %s125, %s127
      %p134 = scmp.eq.s32.totalorder %s28, 1
      %p135 = por %p133, %p134
      %p136 = scmp.ne.s32.totalorder %s127, %s128
      %p137 = scmp.eq.s32.totalorder %s28, 0
      %p138 = por %p136, %p137
      %p139 = scmp.ne.s32.totalorder %s127, %s128
      %p140 = scmp.eq.s32.totalorder %s29, 1
      %p141 = por %p139, %p140
      %p143 = scmp.ne.s32.totalorder %s128, %s142
      %p144 = scmp.eq.s32.totalorder %s29, 0
      %p145 = por %p143, %p144
      %s147 = sadd.s32 %s146, 1
      %p150 = scmp.eq.s32.totalorder %s23, 1
      %p151 = scmp.ne.s32.totalorder %s146, %s148
      %p152 = scmp.eq.s32.totalorder %s23, 0
      %p153 = por %p151, %p152
      %p154 = scmp.ne.s32.totalorder %s146, %s148
      %p155 = scmp.eq.s32.totalorder %s28, 1
      %p156 = por %p154, %p155
      %p157 = scmp.ne.s32.totalorder %s148, %s149
      %p158 = scmp.eq.s32.totalorder %s28, 0
      %p159 = por %p157, %p158
      %p160 = scmp.ne.s32.totalorder %s148, %s149
      %p161 = scmp.eq.s32.totalorder %s29, 1
      %p162 = por %p160, %p161
      %p164 = scmp.ne.s32.totalorder %s149, %s163
      %p165 = scmp.eq.s32.totalorder %s29, 0
      %p166 = por %p164, %p165
      %s168 = sadd.s32 %s167, 1
      %p171 = scmp.eq.s32.totalorder %s23, 1
      %p172 = scmp.ne.s32.totalorder %s167, %s169
      %p173 = scmp.eq.s32.totalorder %s23, 0
      %p174 = por %p172, %p173
      %p175 = scmp.ne.s32.totalorder %s167, %s169
      %p176 = scmp.eq.s32.totalorder %s28, 1
      %p177 = por %p175, %p176
      %p178 = scmp.ne.s32.totalorder %s169, %s170
      %p179 = scmp.eq.s32.totalorder %s28, 0
      %p180 = por %p178, %p179
      %p181 = scmp.ne.s32.totalorder %s169, %s170
      %p182 = scmp.eq.s32.totalorder %s29, 1
      %p183 = por %p181, %p182
      %p185 = scmp.ne.s32.totalorder %s170, %s184
      %p186 = scmp.eq.s32.totalorder %s29, 0
      %p187 = por %p185, %p186
      %s188 = ssub.s32 %s23, %s30
      %p189 = scmp.eq.s32.totalorder %s188, 0
      %s191 = sadd.s32 %s190, 1
      %s192 = scalar_select %p189, %s190, %s191
      %p195 = pneg %p189
      %p196 = scmp.eq.s32.totalorder %s23, 1
      %p197 = por %p195, %p196
      %p198 = scmp.ne.s32.totalorder %s190, %s193
      %p199 = scmp.eq.s32.totalorder %s23, 0
      %p200 = por %p198, %p199
      %p201 = scmp.ne.s32.totalorder %s190, %s193
      %p202 = scmp.eq.s32.totalorder %s28, 1
      %p203 = por %p201, %p202
      %p204 = scmp.ne.s32.totalorder %s193, %s194
      %p205 = scmp.eq.s32.totalorder %s28, 0
      %p206 = por %p204, %p205
      %p207 = scmp.ne.s32.totalorder %s193, %s194
      %p208 = scmp.eq.s32.totalorder %s29, 1
      %p209 = por %p207, %p208
      %p211 = scmp.ne.s32.totalorder %s194, %s210
      %p212 = scmp.eq.s32.totalorder %s29, 0
      %p213 = por %p211, %p212
      %p214 = scmp.le.s32.totalorder 1, %s23
      %p215 = scmp.lt.s32.totalorder %s23, 3
      %p216 = pnand %p214, %p215
      %p217 = pneg %p216
      // Predicated region
      $region9: #{tpu_custom_call.1} parent=5 // pred_check
        _
      $region10: #{tpu_custom_call.1} parent=5 // pred_check_branch
        %219 = sbr.rel (%p216) target = $region12
      $region11: #{tpu_custom_call.1} parent=5 // pred_region
        %s220 = ssub.s32 %s23, 1
        // Predicated region
        $region13: #{tpu_custom_call.1} parent=11 // pred_check
          %p221 = pneg %p96
        $region14: #{tpu_custom_call.1} parent=11 // pred_check_branch
          %223 = sbr.rel (%p221) target = $region16
        $region15: #{tpu_custom_call.1} parent=11 // pred_region
          _
        $region16: #{tpu_custom_call.1} parent=11 // pred_fallthru
          _
        // Predicated region
        $region17: #{tpu_custom_call.1} parent=11 // pred_check
          %p224 = pneg %p117
        $region18: #{tpu_custom_call.1} parent=11 // pred_check_branch
          %226 = sbr.rel (%p224) target = $region20
        $region19: #{tpu_custom_call.1} parent=11 // pred_region
          %s228 = ssub.s32 1024, 1024
          %229 = vsyncadd [#allocation6], %s228
          %s230 = sshll.u32 [#allocation7], 4
          %s231 = int_to_ptr.vmem [resolvable:$true] %s230
          %236 = dma.hbm_to_vmem [thread:$0]  %s3, 1024, %s231, [#allocation6], 64, 64, 4
        $region20: #{tpu_custom_call.1} parent=11 // pred_fallthru
          _
        // Predicated region
        $region21: #{tpu_custom_call.1} parent=11 // pred_check
          %p237 = pneg %p138
        $region22: #{tpu_custom_call.1} parent=11 // pred_check_branch
          %239 = sbr.rel (%p237) target = $region24
        $region23: #{tpu_custom_call.1} parent=11 // pred_region
          %s241 = ssub.s32 256, 256
          %242 = vsyncadd [#allocation9], %s241
          %s243 = sshll.u32 [#allocation8], 4
          %s244 = int_to_ptr.vmem [resolvable:$true] %s243
          %249 = dma.hbm_to_vmem [thread:$0]  %s4, 256, %s244, [#allocation9], 64, 64, 4
        $region24: #{tpu_custom_call.1} parent=11 // pred_fallthru
          _
        // Predicated region
        $region25: #{tpu_custom_call.1} parent=11 // pred_check
          %p250 = pneg %p159
        $region26: #{tpu_custom_call.1} parent=11 // pred_check_branch
          %252 = sbr.rel (%p250) target = $region28
        $region27: #{tpu_custom_call.1} parent=11 // pred_region
          _
        $region28: #{tpu_custom_call.1} parent=11 // pred_fallthru
          _
        // Predicated region
        $region29: #{tpu_custom_call.1} parent=11 // pred_check
          %p253 = pneg %p180
        $region30: #{tpu_custom_call.1} parent=11 // pred_check_branch
          %255 = sbr.rel (%p253) target = $region32
        $region31: #{tpu_custom_call.1} parent=11 // pred_region
          _
        $region32: #{tpu_custom_call.1} parent=11 // pred_fallthru
          _
      $region12: #{tpu_custom_call.1} parent=5 // pred_fallthru
        _
      %p256 = scmp.lt.s32.totalorder %s23, 2
      // Predicated region
      $region33: #{tpu_custom_call.1} parent=5 // pred_check
        %p257 = pneg %p256
      $region34: #{tpu_custom_call.1} parent=5 // pred_check_branch
        %259 = sbr.rel (%p257) target = $region36
      $region35: #{tpu_custom_call.1} parent=5 // pred_region
        // Predicated region
        $region37: #{tpu_custom_call.1} parent=35 // pred_check
          %p260 = pneg %p43
        $region38: #{tpu_custom_call.1} parent=35 // pred_check_branch
          %262 = sbr.rel (%p260) target = $region40
        $region39: #{tpu_custom_call.1} parent=35 // pred_region
          %s263 = sand.u32 %s33, 1
          %s264 = scalar_lea.sflag [#allocation3], %s263
          %s265 = sand.u32 %s33, 1
          %s266 = smul.addr %s265, 8
          %s267 = scalar_lea.vmem [#allocation2], %s266
          %s269 = ssub.s32 128, 128
          %270 = vsyncadd %s264, %s269
          %s271 = smul.addr %s23, 2
          %s272 = smul.addr %s271, 64
          %s273 = scalar_lea.hbm %s0, %s272
          %s274 = sshll.u32 %s267, 4
          %s275 = int_to_ptr.vmem [resolvable:$true] %s274
          %280 = dma.hbm_to_vmem [thread:$0]  %s273, 128, %s275, %s264, 64, 64, 4
        $region40: #{tpu_custom_call.1} parent=35 // pred_fallthru
          _
        // Predicated region
        $region41: #{tpu_custom_call.1} parent=35 // pred_check
          %p281 = pneg %p69
        $region42: #{tpu_custom_call.1} parent=35 // pred_check_branch
          %283 = sbr.rel (%p281) target = $region44
        $region43: #{tpu_custom_call.1} parent=35 // pred_region
          %s284 = sand.u32 %s23, 1
          %s285 = scalar_lea.sflag [#allocation6], %s284
          %s286 = sand.u32 %s59, 1
          %s287 = smul.addr %s286, 8
          %s288 = scalar_lea.vmem [#allocation5], %s287
          %s290 = ssub.s32 128, 128
          %291 = vsyncadd %s285, %s290
          %s292 = smul.addr %s23, 2
          %s293 = smul.addr %s292, 64
          %s294 = scalar_lea.hbm %s1, %s293
          %s295 = sshll.u32 %s288, 4
          %s296 = int_to_ptr.vmem [resolvable:$true] %s295
          %301 = dma.hbm_to_vmem [thread:$0]  %s294, 128, %s296, %s285, 64, 64, 4
        $region44: #{tpu_custom_call.1} parent=35 // pred_fallthru
          _
      $region36: #{tpu_custom_call.1} parent=5 // pred_fallthru
        _
      %p302 = scmp.le.s32.totalorder 1, %s23
      %p303 = scmp.lt.s32.totalorder %s23, 3
      %p304 = pnand %p302, %p303
      %p305 = pneg %p304
      // Predicated region
      $region45: #{tpu_custom_call.1} parent=5 // pred_check
        _
      $region46: #{tpu_custom_call.1} parent=5 // pred_check_branch
        %307 = sbr.rel (%p304) target = $region48
      $region47: #{tpu_custom_call.1} parent=5 // pred_region
        %s308 = ssub.s32 %s23, 1
        %s309 = sand.u32 %s36, 1
        %s310 = scalar_lea.sflag [#allocation3], %s309
        %s311 = sand.u32 %s36, 1
        %s312 = smul.addr %s311, 8
        %s313 = scalar_lea.vmem [#allocation2], %s312
        // Predicated region
        $region49: #{tpu_custom_call.1} parent=47 // pred_check
          %p314 = pneg %p49
        $region50: #{tpu_custom_call.1} parent=47 // pred_check_branch
          %316 = sbr.rel (%p314) target = $region52
        $region51: #{tpu_custom_call.1} parent=47 // pred_region
          %317 = dma.done %s310, 128
        $region52: #{tpu_custom_call.1} parent=47 // pred_fallthru
          _
        %s318 = sand.u32 %s28, 1
        %s319 = scalar_lea.sflag [#allocation6], %s318
        %s320 = sand.u32 %s62, 1
        %s321 = smul.addr %s320, 8
        %s322 = scalar_lea.vmem [#allocation5], %s321
        // Predicated region
        $region53: #{tpu_custom_call.1} parent=47 // pred_check
          %p323 = pneg %p75
        $region54: #{tpu_custom_call.1} parent=47 // pred_check_branch
          %325 = sbr.rel (%p323) target = $region56
        $region55: #{tpu_custom_call.1} parent=47 // pred_region
          %326 = dma.done %s319, 128
        $region56: #{tpu_custom_call.1} parent=47 // pred_fallthru
          _
        // Predicated region
        $region57: #{tpu_custom_call.1} parent=47 // pred_check
          %p327 = pneg %p117
        $region58: #{tpu_custom_call.1} parent=47 // pred_check_branch
          %329 = sbr.rel (%p327) target = $region60
        $region59: #{tpu_custom_call.1} parent=47 // pred_region
          %330 = dma.done [#allocation6], 1024
        $region60: #{tpu_custom_call.1} parent=47 // pred_fallthru
          _
        // Predicated region
        $region61: #{tpu_custom_call.1} parent=47 // pred_check
          %p331 = pneg %p138
        $region62: #{tpu_custom_call.1} parent=47 // pred_check_branch
          %333 = sbr.rel (%p331) target = $region64
        $region63: #{tpu_custom_call.1} parent=47 // pred_region
          %334 = dma.done [#allocation9], 256
        $region64: #{tpu_custom_call.1} parent=47 // pred_fallthru
          _
        %s335 = sand.u32 %s36, 1
        %s336 = scalar_lea.sflag [#allocation3], %s335
        %s337 = sand.u32 %s36, 1
        %s338 = smul.addr %s337, 8
        %s339 = scalar_lea.vmem [#allocation2], %s338
        %p340 = pneg %p49
        %p341 = pneg %p46
        %s342 = sand.u32 %s28, 1
        %s343 = scalar_lea.sflag [#allocation6], %s342
        %s344 = sand.u32 %s62, 1
        %s345 = smul.addr %s344, 8
        %s346 = scalar_lea.vmem [#allocation5], %s345
        %p347 = pneg %p75
        %p348 = pneg %p72
        %p349 = pneg %p96
        %p350 = pneg %p93
        %p351 = pneg %p117
        %p352 = pneg %p114
        %p353 = pneg %p138
        %p354 = pneg %p135
        %p355 = pneg %p159
        %p356 = pneg %p156
        %p357 = pneg %p180
        %p358 = pneg %p177
        %p359 = pneg %p206
        %p360 = pneg %p203
        %s361 = sand.u32 %s193, 1
        %s362 = scalar_lea.sflag [#allocation4], %s361
        %s363 = sand.u32 %s193, 1
        %s364 = smul.addr %s363, 2
        %s365 = scalar_lea.vmem [#allocation10], %s364
        %v367 = vld [vmem:[%s313] sm:$0xf]
        %v368 = vld [vmem:[%s313 + $0x4] sm:$0xf]
        %v369 = vld [vmem:[%s322] sm:$0xf]
        %v370 = vld [vmem:[%s322 + $0x4] sm:$0xf]
        %v371 = vld [vmem:[%s5] sm:$0xf]
        %v374 = vunpack.c.l.b16 %v367
        %v375 = vunpack.c.l.b16 %v368
        %v376 = vpack.c.b16 %v375, %v374
        %v379 = vunpack.c.l.b16 %v369
        %v380 = vunpack.c.l.b16 %v370
        %v381 = vpack.c.b16 %v380, %v379
        %vm383 = vcmask 130048
        %v385 = vsel %vm383, %v376, 0
        %387 = vmatprep.subr.bf16.mxu0 0
        %388 = vmatpush1.bf16.msra.mxu0 %v381
        %389 = vmatprep.subr.bf16.mxu0 0
        %390 = vmatpush1.bf16.msra.mxu0 0
        %391 = vmatprep.subr.bf16.mxu0 0
        %392 = vmatpush1.bf16.msra.mxu0 0
        %393 = vmatprep.subr.bf16.mxu0 0
        %394 = vmatpush1.bf16.msra.mxu0 0
        %395 = vmatprep.subr.bf16.mxu0 0
        %396 = vmatpush1.bf16.msra.mxu0 0
        %397 = vmatprep.subr.bf16.mxu0 0
        %398 = vmatpush1.bf16.msra.mxu0 0
        %399 = vmatprep.subr.bf16.mxu0 0
        %400 = vmatpush1.bf16.msra.mxu0 0
        %401 = vmatprep.subr.bf16.mxu0 0
        %402 = vmatpush1.bf16.msra.mxu0 0
        %403 = vmatprep.subr.bf16.mxu0 0
        %404 = vmatpush1.bf16.msra.mxu0 0
        %405 = vmatprep.subr.bf16.mxu0 0
        %406 = vmatpush1.bf16.msra.mxu0 0
        %407 = vmatprep.subr.bf16.mxu0 0
        %408 = vmatpush1.bf16.msra.mxu0 0
        %409 = vmatprep.subr.bf16.mxu0 0
        %410 = vmatpush1.bf16.msra.mxu0 0
        %411 = vmatprep.subr.bf16.mxu0 0
        %412 = vmatpush1.bf16.msra.mxu0 0
        %413 = vmatprep.subr.bf16.mxu0 0
        %414 = vmatpush1.bf16.msra.mxu0 0
        %415 = vmatprep.subr.bf16.mxu0 0
        %416 = vmatpush1.bf16.msra.mxu0 0
        %417 = vmatprep.subr.bf16.mxu0 0
        %418 = vmatpush1.bf16.msra.mxu0 0
        %419 = vmatprep.mubr.bf16.mxu0 0
        %420 = vmatmul.mubr.bf16.gmra.mrb[0].mxu0 %v385
        %v421 = vpop.f32.mrb[0].mxu0
        %v422 = vadd.f32 0.0, %v421
        %v423 = vpop.f32.mrb[0].mxu0
        %v424 = vpop.f32.mrb[0].mxu0
        %v425 = vadd.f32 0.0, %v424
        %v426 = vpop.f32.mrb[0].mxu0
        %427 = vdwg.mxu0
        %v428 = vpack.c.bf16 %v425, %v422
        %v429 = vld [vmem:[#allocation7] sm:$0xf]
        %v430 = vld [vmem:[#allocation7 + $0x4] sm:$0xf]
        %v431 = vld [vmem:[#allocation7 + $0x8] sm:$0xf]
        %v432 = vld [vmem:[#allocation7 + $0xc] sm:$0xf]
        %v433 = vlaneseq
        %v434 = vshrl.u32 %v433, 7
        %v435 = vsub.s32 0, %v434
        %v436 = vrot.slane %v371, %v435
        %v441 = vunpack.c.l.b16 %v429
        %v442 = vunpack.c.l.b16 %v430
        %v443 = vunpack.c.l.b16 %v431
        %v444 = vunpack.c.l.b16 %v432
        %v445 = vpack.c.b16 %v442, %v441
        %v446 = vpack.c.b16 %v444, %v443
        %vm449 = vcmask 261120
        %v451 = vsel %vm449, %v428, 0
        %453 = vmatprep.subr.bf16.mxu0 0
        %454 = vmatpush1.bf16.msra.mxu0 %v445
        %455 = vmatprep.subr.bf16.mxu0 0
        %456 = vmatpush1.bf16.msra.mxu0 %v446
        %457 = vmatprep.subr.bf16.mxu0 0
        %458 = vmatpush1.bf16.msra.mxu0 0
        %459 = vmatprep.subr.bf16.mxu0 0
        %460 = vmatpush1.bf16.msra.mxu0 0
        %461 = vmatprep.subr.bf16.mxu0 0
        %462 = vmatpush1.bf16.msra.mxu0 0
        %463 = vmatprep.subr.bf16.mxu0 0
        %464 = vmatpush1.bf16.msra.mxu0 0
        %465 = vmatprep.subr.bf16.mxu0 0
        %466 = vmatpush1.bf16.msra.mxu0 0
        %467 = vmatprep.subr.bf16.mxu0 0
        %468 = vmatpush1.bf16.msra.mxu0 0
        %469 = vmatprep.subr.bf16.mxu0 0
        %470 = vmatpush1.bf16.msra.mxu0 0
        %471 = vmatprep.subr.bf16.mxu0 0
        %472 = vmatpush1.bf16.msra.mxu0 0
        %473 = vmatprep.subr.bf16.mxu0 0
        %474 = vmatpush1.bf16.msra.mxu0 0
        %475 = vmatprep.subr.bf16.mxu0 0
        %476 = vmatpush1.bf16.msra.mxu0 0
        %477 = vmatprep.subr.bf16.mxu0 0
        %478 = vmatpush1.bf16.msra.mxu0 0
        %479 = vmatprep.subr.bf16.mxu0 0
        %480 = vmatpush1.bf16.msra.mxu0 0
        %481 = vmatprep.subr.bf16.mxu0 0
        %482 = vmatpush1.bf16.msra.mxu0 0
        %483 = vmatprep.subr.bf16.mxu0 0
        %484 = vmatpush1.bf16.msra.mxu0 0
        %485 = vmatprep.mubr.bf16.mxu0 0
        %486 = vmatmul.mubr.bf16.gmra.mrb[0].mxu0 %v451
        %v487 = vpop.f32.mrb[0].mxu0
        %v488 = vadd.f32 %v436, %v487
        %v489 = vpop.f32.mrb[0].mxu0
        %v490 = vpop.f32.mrb[0].mxu0
        %v491 = vadd.f32 %v436, %v490
        %v492 = vpop.f32.mrb[0].mxu0
        %493 = vdwg.mxu0
        %v494 = vmax.f32 %v488, 0.0
        %v495 = vmax.f32 %v491, 0.0
        %v496 = vpack.c.bf16 %v495, %v494
        %497 = vmatprep.subr.bf16.mxu0 0
        %498 = vmatpush1.bf16.msra.mxu0 %v496
        %499 = vmatprep.subr.bf16.mxu0 0
        %500 = vmatpush1.bf16.msra.mxu0 0
        %501 = vmatprep.subr.bf16.mxu0 0
        %502 = vmatpush1.bf16.msra.mxu0 0
        %503 = vmatprep.subr.bf16.mxu0 0
        %504 = vmatpush1.bf16.msra.mxu0 0
        %505 = vmatprep.subr.bf16.mxu0 0
        %506 = vmatpush1.bf16.msra.mxu0 0
        %507 = vmatprep.subr.bf16.mxu0 0
        %508 = vmatpush1.bf16.msra.mxu0 0
        %509 = vmatprep.subr.bf16.mxu0 0
        %510 = vmatpush1.bf16.msra.mxu0 0
        %511 = vmatprep.subr.bf16.mxu0 0
        %512 = vmatpush1.bf16.msra.mxu0 0
        %513 = vmatprep.subr.bf16.mxu0 0
        %514 = vmatpush1.bf16.msra.mxu0 0
        %515 = vmatprep.subr.bf16.mxu0 0
        %516 = vmatpush1.bf16.msra.mxu0 0
        %517 = vmatprep.subr.bf16.mxu0 0
        %518 = vmatpush1.bf16.msra.mxu0 0
        %519 = vmatprep.subr.bf16.mxu0 0
        %520 = vmatpush1.bf16.msra.mxu0 0
        %521 = vmatprep.subr.bf16.mxu0 0
        %522 = vmatpush1.bf16.msra.mxu0 0
        %523 = vmatprep.subr.bf16.mxu0 0
        %524 = vmatpush1.bf16.msra.mxu0 0
        %525 = vmatprep.subr.bf16.mxu0 0
        %526 = vmatpush1.bf16.msra.mxu0 0
        %527 = vmatprep.subr.bf16.mxu0 0
        %528 = vmatpush1.bf16.msra.mxu0 0
        %529 = vmatprep.mubr.bf16.mxu0 0
        %530 = vmatmul.mubr.bf16.gmra.mrb[0].mxu0 %v385
        %v531 = vpop.f32.mrb[0].mxu0
        %v532 = vadd.f32 0.0, %v531
        %v533 = vpop.f32.mrb[0].mxu0
        %v534 = vpop.f32.mrb[0].mxu0
        %v535 = vadd.f32 0.0, %v534
        %v536 = vpop.f32.mrb[0].mxu0
        %537 = vdwg.mxu0
        %v538 = vpack.c.bf16 %v535, %v532
        %s539 = scalar_lea.vmem [#allocation7], 16
        %v540 = vld [vmem:[%s539] sm:$0xf]
        %v541 = vld [vmem:[%s539 + $0x4] sm:$0xf]
        %v542 = vld [vmem:[%s539 + $0x8] sm:$0xf]
        %v543 = vld [vmem:[%s539 + $0xc] sm:$0xf]
        %v544 = vlaneseq
        %v545 = vshrl.u32 %v544, 7
        %v546 = vsub.s32 1, %v545
        %v547 = vrot.slane %v371, %v546
        %v552 = vunpack.c.l.b16 %v540
        %v553 = vunpack.c.l.b16 %v541
        %v554 = vunpack.c.l.b16 %v542
        %v555 = vunpack.c.l.b16 %v543
        %v556 = vpack.c.b16 %v553, %v552
        %v557 = vpack.c.b16 %v555, %v554
        %v561 = vsel %vm449, %v538, 0
        %563 = vmatprep.subr.bf16.mxu0 0
        %564 = vmatpush1.bf16.msra.mxu0 %v556
        %565 = vmatprep.subr.bf16.mxu0 0
        %566 = vmatpush1.bf16.msra.mxu0 %v557
        %567 = vmatprep.subr.bf16.mxu0 0
        %568 = vmatpush1.bf16.msra.mxu0 0
        %569 = vmatprep.subr.bf16.mxu0 0
        %570 = vmatpush1.bf16.msra.mxu0 0
        %571 = vmatprep.subr.bf16.mxu0 0
        %572 = vmatpush1.bf16.msra.mxu0 0
        %573 = vmatprep.subr.bf16.mxu0 0
        %574 = vmatpush1.bf16.msra.mxu0 0
        %575 = vmatprep.subr.bf16.mxu0 0
        %576 = vmatpush1.bf16.msra.mxu0 0
        %577 = vmatprep.subr.bf16.mxu0 0
        %578 = vmatpush1.bf16.msra.mxu0 0
        %579 = vmatprep.subr.bf16.mxu0 0
        %580 = vmatpush1.bf16.msra.mxu0 0
        %581 = vmatprep.subr.bf16.mxu0 0
        %582 = vmatpush1.bf16.msra.mxu0 0
        %583 = vmatprep.subr.bf16.mxu0 0
        %584 = vmatpush1.bf16.msra.mxu0 0
        %585 = vmatprep.subr.bf16.mxu0 0
        %586 = vmatpush1.bf16.msra.mxu0 0
        %587 = vmatprep.subr.bf16.mxu0 0
        %588 = vmatpush1.bf16.msra.mxu0 0
        %589 = vmatprep.subr.bf16.mxu0 0
        %590 = vmatpush1.bf16.msra.mxu0 0
        %591 = vmatprep.subr.bf16.mxu0 0
        %592 = vmatpush1.bf16.msra.mxu0 0
        %593 = vmatprep.subr.bf16.mxu0 0
        %594 = vmatpush1.bf16.msra.mxu0 0
        %595 = vmatprep.mubr.bf16.mxu0 0
        %596 = vmatmul.mubr.bf16.gmra.mrb[0].mxu0 %v561
        %v597 = vpop.f32.mrb[0].mxu0
        %v598 = vadd.f32 %v547, %v597
        %v599 = vpop.f32.mrb[0].mxu0
        %v600 = vpop.f32.mrb[0].mxu0
        %v601 = vadd.f32 %v547, %v600
        %v602 = vpop.f32.mrb[0].mxu0
        %603 = vdwg.mxu0
        %v604 = vmax.f32 %v598, 0.0
        %v605 = vmax.f32 %v601, 0.0
        %v606 = vld [vmem:[%s2] sm:$0x1]
        %v607 = vpack.c.bf16 %v605, %v604
        %v609 = vsel %vm383, %v606, 0
        %611 = vmatprep.subr.bf16.mxu0 0
        %612 = vmatpush1.bf16.msra.mxu0 %v607
        %613 = vmatprep.subr.bf16.mxu0 0
        %614 = vmatpush1.bf16.msra.mxu0 0
        %615 = vmatprep.subr.bf16.mxu0 0
        %616 = vmatpush1.bf16.msra.mxu0 0
        %617 = vmatprep.subr.bf16.mxu0 0
        %618 = vmatpush1.bf16.msra.mxu0 0
        %619 = vmatprep.subr.bf16.mxu0 0
        %620 = vmatpush1.bf16.msra.mxu0 0
        %621 = vmatprep.subr.bf16.mxu0 0
        %622 = vmatpush1.bf16.msra.mxu0 0
        %623 = vmatprep.subr.bf16.mxu0 0
        %624 = vmatpush1.bf16.msra.mxu0 0
        %625 = vmatprep.subr.bf16.mxu0 0
        %626 = vmatpush1.bf16.msra.mxu0 0
        %627 = vmatprep.subr.bf16.mxu0 0
        %628 = vmatpush1.bf16.msra.mxu0 0
        %629 = vmatprep.subr.bf16.mxu0 0
        %630 = vmatpush1.bf16.msra.mxu0 0
        %631 = vmatprep.subr.bf16.mxu0 0
        %632 = vmatpush1.bf16.msra.mxu0 0
        %633 = vmatprep.subr.bf16.mxu0 0
        %634 = vmatpush1.bf16.msra.mxu0 0
        %635 = vmatprep.subr.bf16.mxu0 0
        %636 = vmatpush1.bf16.msra.mxu0 0
        %637 = vmatprep.subr.bf16.mxu0 0
        %638 = vmatpush1.bf16.msra.mxu0 0
        %639 = vmatprep.subr.bf16.mxu0 0
        %640 = vmatpush1.bf16.msra.mxu0 0
        %641 = vmatprep.subr.bf16.mxu0 0
        %642 = vmatpush1.bf16.msra.mxu0 0
        %643 = vmatprep.mubr.bf16.mxu0 0
        %644 = vmatmul.mubr.bf16.gmra.mrb[0].mxu0 %v609
        %v645 = vpop.f32.mrb[0].mxu0
        %v646 = vadd.f32 0.0, %v645
        %v647 = vpop.f32.mrb[0].mxu0
        %v648 = vpop.f32.mrb[0].mxu0
        %v649 = vpop.f32.mrb[0].mxu0
        %650 = vdwg.mxu0
        %v651 = vmul.f32 %v646, 0.125
        %v652 = vpack.c.bf16 %v651, %v651
        %s653 = scalar_lea.vmem [#allocation7], 32
        %v654 = vld [vmem:[%s653] sm:$0xf]
        %v655 = vld [vmem:[%s653 + $0x4] sm:$0xf]
        %v656 = vld [vmem:[%s653 + $0x8] sm:$0xf]
        %v657 = vld [vmem:[%s653 + $0xc] sm:$0xf]
        %v658 = vlaneseq
        %v659 = vshrl.u32 %v658, 7
        %v660 = vsub.s32 2, %v659
        %v661 = vrot.slane %v371, %v660
        %v666 = vunpack.c.l.b16 %v654
        %v667 = vunpack.c.l.b16 %v655
        %v668 = vunpack.c.l.b16 %v656
        %v669 = vunpack.c.l.b16 %v657
        %v670 = vpack.c.b16 %v667, %v666
        %v671 = vpack.c.b16 %v669, %v668
        %v675 = vsel %vm449, %v652, 0
        %677 = vmatprep.subr.bf16.mxu0 0
        %678 = vmatpush1.bf16.msra.mxu0 %v670
        %679 = vmatprep.subr.bf16.mxu0 0
        %680 = vmatpush1.bf16.msra.mxu0 %v671
        %681 = vmatprep.subr.bf16.mxu0 0
        %682 = vmatpush1.bf16.msra.mxu0 0
        %683 = vmatprep.subr.bf16.mxu0 0
        %684 = vmatpush1.bf16.msra.mxu0 0
        %685 = vmatprep.subr.bf16.mxu0 0
        %686 = vmatpush1.bf16.msra.mxu0 0
        %687 = vmatprep.subr.bf16.mxu0 0
        %688 = vmatpush1.bf16.msra.mxu0 0
        %689 = vmatprep.subr.bf16.mxu0 0
        %690 = vmatpush1.bf16.msra.mxu0 0
        %691 = vmatprep.subr.bf16.mxu0 0
        %692 = vmatpush1.bf16.msra.mxu0 0
        %693 = vmatprep.subr.bf16.mxu0 0
        %694 = vmatpush1.bf16.msra.mxu0 0
        %695 = vmatprep.subr.bf16.mxu0 0
        %696 = vmatpush1.bf16.msra.mxu0 0
        %697 = vmatprep.subr.bf16.mxu0 0
        %698 = vmatpush1.bf16.msra.mxu0 0
        %699 = vmatprep.subr.bf16.mxu0 0
        %700 = vmatpush1.bf16.msra.mxu0 0
        %701 = vmatprep.subr.bf16.mxu0 0
        %702 = vmatpush1.bf16.msra.mxu0 0
        %703 = vmatprep.subr.bf16.mxu0 0
        %704 = vmatpush1.bf16.msra.mxu0 0
        %705 = vmatprep.subr.bf16.mxu0 0
        %706 = vmatpush1.bf16.msra.mxu0 0
        %707 = vmatprep.subr.bf16.mxu0 0
        %708 = vmatpush1.bf16.msra.mxu0 0
        %709 = vmatprep.mubr.bf16.mxu0 0
        %710 = vmatmul.mubr.bf16.gmra.mrb[0].mxu0 %v675
        %v711 = vpop.f32.mrb[0].mxu0
        %v712 = vadd.f32 %v661, %v711
        %v713 = vpop.f32.mrb[0].mxu0
        %v714 = vpop.f32.mrb[0].mxu0
        %v715 = vpop.f32.mrb[0].mxu0
        %716 = vdwg.mxu0
        %v717 = vmax.f32 %v712, 0.0
        %v718 = vpack.c.bf16 %v717, %v717
        %s719 = scalar_lea.vmem [#allocation7], 48
        %v720 = vld [vmem:[%s719] sm:$0xf]
        %v721 = vld [vmem:[%s719 + $0x4] sm:$0xf]
        %v722 = vld [vmem:[%s719 + $0x8] sm:$0xf]
        %v723 = vld [vmem:[%s719 + $0xc] sm:$0xf]
        %v724 = vlaneseq
        %v725 = vshrl.u32 %v724, 7
        %v726 = vsub.s32 3, %v725
        %v727 = vrot.slane %v371, %v726
        %v732 = vunpack.c.l.b16 %v720
        %v733 = vunpack.c.l.b16 %v721
        %v734 = vunpack.c.l.b16 %v722
        %v735 = vunpack.c.l.b16 %v723
        %v736 = vpack.c.b16 %v733, %v732
        %v737 = vpack.c.b16 %v735, %v734
        %v741 = vsel %vm449, %v718, 0
        %743 = vmatprep.subr.bf16.mxu0 0
        %744 = vmatpush1.bf16.msra.mxu0 %v736
        %745 = vmatprep.subr.bf16.mxu0 0
        %746 = vmatpush1.bf16.msra.mxu0 %v737
        %747 = vmatprep.subr.bf16.mxu0 0
        %748 = vmatpush1.bf16.msra.mxu0 0
        %749 = vmatprep.subr.bf16.mxu0 0
        %750 = vmatpush1.bf16.msra.mxu0 0
        %751 = vmatprep.subr.bf16.mxu0 0
        %752 = vmatpush1.bf16.msra.mxu0 0
        %753 = vmatprep.subr.bf16.mxu0 0
        %754 = vmatpush1.bf16.msra.mxu0 0
        %755 = vmatprep.subr.bf16.mxu0 0
        %756 = vmatpush1.bf16.msra.mxu0 0
        %757 = vmatprep.subr.bf16.mxu0 0
        %758 = vmatpush1.bf16.msra.mxu0 0
        %759 = vmatprep.subr.bf16.mxu0 0
        %760 = vmatpush1.bf16.msra.mxu0 0
        %761 = vmatprep.subr.bf16.mxu0 0
        %762 = vmatpush1.bf16.msra.mxu0 0
        %763 = vmatprep.subr.bf16.mxu0 0
        %764 = vmatpush1.bf16.msra.mxu0 0
        %765 = vmatprep.subr.bf16.mxu0 0
        %766 = vmatpush1.bf16.msra.mxu0 0
        %767 = vmatprep.subr.bf16.mxu0 0
        %768 = vmatpush1.bf16.msra.mxu0 0
        %769 = vmatprep.subr.bf16.mxu0 0
        %770 = vmatpush1.bf16.msra.mxu0 0
        %771 = vmatprep.subr.bf16.mxu0 0
        %772 = vmatpush1.bf16.msra.mxu0 0
        %773 = vmatprep.subr.bf16.mxu0 0
        %774 = vmatpush1.bf16.msra.mxu0 0
        %775 = vmatprep.mubr.bf16.mxu0 0
        %776 = vmatmul.mubr.bf16.gmra.mrb[0].mxu0 %v741
        %v777 = vpop.f32.mrb[0].mxu0
        %v778 = vadd.f32 %v727, %v777
        %v779 = vpop.f32.mrb[0].mxu0
        %v780 = vpop.f32.mrb[0].mxu0
        %v781 = vpop.f32.mrb[0].mxu0
        %782 = vdwg.mxu0
        %v783 = vmax.f32 %v778, 0.0
        %v784 = vpack.c.bf16 %v783, %v783
        %v785 = vld [vmem:[#allocation8] sm:$0xf]
        %v786 = vld [vmem:[#allocation8 + $0x4] sm:$0xf]
        %v787 = vld [vmem:[#allocation8 + $0x8] sm:$0xf]
        %v788 = vld [vmem:[#allocation8 + $0xc] sm:$0xf]
        %v789 = vld [vmem:[%s6] sm:$0x1]
        %v791 = vlaneseq
        %v792 = vshrl.u32 %v791, 7
        %v793 = vsub.s32 0, %v792
        %v794 = vrot.slane %v789, %v793
        %v800 = vunpack.c.l.b16 %v785
        %v801 = vunpack.c.l.b16 %v786
        %v802 = vunpack.c.l.b16 %v787
        %v803 = vunpack.c.l.b16 %v788
        %v804 = vpack.c.b16 %v801, %v800
        %v805 = vpack.c.b16 %v803, %v802
        %v809 = vsel %vm449, %v784, 0
        %811 = vmatprep.subr.bf16.mxu0 0
        %812 = vmatpush1.bf16.msra.mxu0 %v804
        %813 = vmatprep.subr.bf16.mxu0 0
        %814 = vmatpush1.bf16.msra.mxu0 %v805
        %815 = vmatprep.subr.bf16.mxu0 0
        %816 = vmatpush1.bf16.msra.mxu0 0
        %817 = vmatprep.subr.bf16.mxu0 0
        %818 = vmatpush1.bf16.msra.mxu0 0
        %819 = vmatprep.subr.bf16.mxu0 0
        %820 = vmatpush1.bf16.msra.mxu0 0
        %821 = vmatprep.subr.bf16.mxu0 0
        %822 = vmatpush1.bf16.msra.mxu0 0
        %823 = vmatprep.subr.bf16.mxu0 0
        %824 = vmatpush1.bf16.msra.mxu0 0
        %825 = vmatprep.subr.bf16.mxu0 0
        %826 = vmatpush1.bf16.msra.mxu0 0
        %827 = vmatprep.subr.bf16.mxu0 0
        %828 = vmatpush1.bf16.msra.mxu0 0
        %829 = vmatprep.subr.bf16.mxu0 0
        %830 = vmatpush1.bf16.msra.mxu0 0
        %831 = vmatprep.subr.bf16.mxu0 0
        %832 = vmatpush1.bf16.msra.mxu0 0
        %833 = vmatprep.subr.bf16.mxu0 0
        %834 = vmatpush1.bf16.msra.mxu0 0
        %835 = vmatprep.subr.bf16.mxu0 0
        %836 = vmatpush1.bf16.msra.mxu0 0
        %837 = vmatprep.subr.bf16.mxu0 0
        %838 = vmatpush1.bf16.msra.mxu0 0
        %839 = vmatprep.subr.bf16.mxu0 0
        %840 = vmatpush1.bf16.msra.mxu0 0
        %841 = vmatprep.subr.bf16.mxu0 0
        %842 = vmatpush1.bf16.msra.mxu0 0
        %843 = vmatprep.mubr.bf16.mxu0 0
        %844 = vmatmul.mubr.bf16.gmra.mrb[0].mxu0 %v809
        %v845 = vpop.f32.mrb[0].mxu0
        %v846 = vadd.f32 %v794, %v845
        %v847 = vpop.f32.mrb[0].mxu0
        %v848 = vpop.f32.mrb[0].mxu0
        %v849 = vpop.f32.mrb[0].mxu0
        %850 = vdwg.mxu0
        %851 = vst [vmem:[%s365] sm:$0x3] %v846
        %s852 = sand.u32 %s193, 1
        %s853 = scalar_lea.sflag [#allocation4], %s852
        %s854 = sand.u32 %s193, 1
        %s855 = smul.addr %s854, 2
        %s856 = scalar_lea.vmem [#allocation10], %s855
        // Predicated region
        $region65: #{tpu_custom_call.1} parent=47 // pred_check
          %p857 = pneg %p203
        $region66: #{tpu_custom_call.1} parent=47 // pred_check_branch
          %859 = sbr.rel (%p857) target = $region68
        $region67: #{tpu_custom_call.1} parent=47 // pred_region
          %s861 = ssub.s32 32, 32
          %862 = vsyncadd %s853, %s861
          %s863 = smul.addr %s28, 32
          %s864 = scalar_lea.hbm %s7, %s863
          %s866 = sshll.u32 %s856, 4
          %s867 = int_to_ptr.vmem [resolvable:$true] %s866
          %869 = dma.vmem_to_hbm [thread:$0]  %s867, 32, %s864, %s853
        $region68: #{tpu_custom_call.1} parent=47 // pred_fallthru
          _
      $region48: #{tpu_custom_call.1} parent=5 // pred_fallthru
        _
      %p870 = scmp.le.s32.totalorder 2, %s23
      // Predicated region
      $region69: #{tpu_custom_call.1} parent=5 // pred_check
        %p871 = pneg %p870
      $region70: #{tpu_custom_call.1} parent=5 // pred_check_branch
        %873 = sbr.rel (%p871) target = $region72
      $region71: #{tpu_custom_call.1} parent=5 // pred_region
        %s874 = ssub.s32 %s23, 2
        // Predicated region
        $region73: #{tpu_custom_call.1} parent=71 // pred_check
          %p875 = pneg %p209
        $region74: #{tpu_custom_call.1} parent=71 // pred_check_branch
          %877 = sbr.rel (%p875) target = $region76
        $region75: #{tpu_custom_call.1} parent=71 // pred_region
          %s878 = sand.u32 %s194, 1
          %s879 = scalar_lea.sflag [#allocation4], %s878
          %s880 = sand.u32 %s194, 1
          %s881 = smul.addr %s880, 2
          %s882 = scalar_lea.vmem [#allocation10], %s881
          %883 = dma.done %s879, 32
        $region76: #{tpu_custom_call.1} parent=71 // pred_fallthru
          _
      $region72: #{tpu_custom_call.1} parent=5 // pred_fallthru
        _
    $region6: #{tpu_custom_call.1} parent=1 // loop_footer
      %s27 = sadd.s32 1, %s23
    $region7: #{tpu_custom_call.1} parent=1 // loop_footer_branch
      %22 = sbr.rel target = $region3
    $region8: #{tpu_custom_call.1} parent=1 // loop_exit
      _
    %884 = vsyncpa [#allocation3], 1
    %s885 = scalar_lea.sflag [#allocation3], 1
    %886 = vsyncpa %s885, 1
    %887 = vsyncpa [#allocation6], 1
    %s888 = scalar_lea.sflag [#allocation6], 1
    %889 = vsyncpa %s888, 1
    %890 = vsyncpa [#allocation9], 1
    %891 = vsyncpa [#allocation4], 1
    %s892 = scalar_lea.sflag [#allocation4], 1
    %893 = vsyncpa %s892, 1

</llo_original>
